<compile_context>
chip_gen: v6e
topology: v6e:2x2x1
jax: 0.10.0
libtpu: 0.0.40
codegen_flags: <defaults>
</compile_context>

<pallas_src>
import jax
import jax.numpy as jnp
from jax.experimental import pallas as pl
from jax.experimental.pallas import tpu as pltpu


def _round_up(x, m):
    return ((x + m - 1) // m) * m


def lstm_classifier_kernel(x_ref, wih_t_ref, whh_t_ref, b_ref,
                           w1_t_ref, b1_ref, w2_t_ref, b2_ref,
                           out_ref, xw_ref):
    # x_ref:     (S, TB, E)  bf16 time-major embedded batch tile
    # wih_t_ref: (E, 4H) bf16, whh_t_ref: (H, 4H) bf16  (i/f/o cols pre-scaled 0.5)
    # b_ref:     (1, 4H) f32  == b_ih + b_hh  (i/f/o cols pre-scaled 0.5)
    # w1_t_ref:  (H, F1p) f32, b1_ref: (1, F1p) f32     (50 zero-padded to 128)
    # w2_t_ref:  (F1p, Lp) f32, b2_ref: (1, Lp) f32
    # out_ref:   (TB, Lp) f32
    # xw_ref:    (S*TB, 4H) f32 VMEM scratch (hoisted input projection)
    S, TB, E = x_ref.shape
    H = whh_t_ref.shape[0]

    whh_t = whh_t_ref[...]                                   # (H, 4H) bf16

    # Hoisted input projection for ALL timesteps: one big bf16 MXU matmul off
    # the serial recurrence chain; bias folded in once.
    x_all = x_ref[...].reshape(S * TB, E)                    # leading-dim collapse
    xw_ref[...] = (jnp.dot(x_all, wih_t_ref[...],
                           preferred_element_type=jnp.float32)
                   + b_ref[...])                             # (S*TB, 4H) f32

    def step(xw_t, h, c):
        # Only h @ Whh^T remains on the serial chain (bf16 operands, f32 acc).
        gates = xw_t + jnp.dot(h.astype(jnp.bfloat16), whh_t,
                               preferred_element_type=jnp.float32)   # (TB,4H)
        # Single EUP pass: i/f/o pre-activations were pre-scaled by 0.5 so
        # sigmoid(z) == 0.5*tanh(z/2) + 0.5 falls out of one tanh.
        t_act = jnp.tanh(gates)
        sig = 0.5 * t_act + 0.5
        i_g = sig[:, 0 * H:1 * H]
        f_g = sig[:, 1 * H:2 * H]
        g_g = t_act[:, 2 * H:3 * H]
        o_g = sig[:, 3 * H:4 * H]
        c_new = f_g * c + i_g * g_g                          # f32 state
        h_new = o_g * jnp.tanh(c_new)
        return h_new, c_new

    h = jnp.zeros((TB, H), jnp.float32)
    c = jnp.zeros((TB, H), jnp.float32)

    if S <= 32:
        # Small S: full unroll -> static sublane-aligned slices, LLO visibility.
        for t in range(S):
            h, c = step(xw_ref[t * TB:(t + 1) * TB, :], h, c)
    else:
        # Large S: moderately-unrolled fori_loop bounds vreg live ranges.
        def body(t, carry):
            hh, cc = carry
            row0 = pl.multiple_of(t * TB, 8)
            return step(xw_ref[pl.ds(row0, TB), :], hh, cc)
        h, c = jax.lax.fori_loop(0, S, body, (h, c), unroll=4)

    # final_c.permute(1,0,2).sum(dim=1) with num_layers*num_dirs == 1 -> identity.
    hid = jnp.dot(c, w1_t_ref[...],
                  preferred_element_type=jnp.float32) + b1_ref[...]
    hid = jnp.maximum(hid, 0.0)                              # ReLU; padded cols stay 0
    # TODO(synk): nn.Dropout(p=0.1) is identity in eval mode; training-mode
    # dropout is not modeled.
    out_ref[...] = jnp.dot(hid, w2_t_ref[...],
                           preferred_element_type=jnp.float32) + b2_ref[...]


def lstm_classifier_forward(x_tokens, emb_matrix,
                            wih, whh, b_ih, b_hh, w1, b1, w2, b2):
    B, S = x_tokens.shape
    H = whh.shape[1]
    E = emb_matrix.shape[1]
    F1 = w1.shape[0]
    L = w2.shape[0]

    L_pad = _round_up(max(L, 1), 128)
    F1_pad = _round_up(max(F1, 1), 128)

    # Batch tile: budget hoisted xw (S*TB*4H f32) + double-buffered bf16 x
    # tile to ~40 MiB so one tile fits v7x's 64 MiB VMEM with headroom.
    per_row_bytes = S * (4 * H * 4 + 2 * E * 2) + 2 * L_pad * 4
    tb_cap = max(16, min(512, (40 * 1024 * 1024) // max(per_row_bytes, 1)))
    tb_cap = max(16, (tb_cap // 16) * 16)
    B8 = _round_up(max(B, 1), 8)
    TB = min(B8, tb_cap)
    B_pad = _round_up(B8, TB)

    # --- plain-JAX glue: gather DIRECTLY into time-major (S, B, E) (single
    # pass, no separate transpose), cast matmul operands to bf16, pad batch.
    # TODO(synk): for large B*S, fuse the embedding gather into the kernel via
    # PrefetchScalarGridSpec scalar-prefetched token ids + DMA row gather.
    x_emb = jnp.take(emb_matrix, x_tokens.T, axis=0).astype(jnp.bfloat16)  # (S,B,E)
    if B_pad != B:
        x_emb = jnp.pad(x_emb, ((0, 0), (0, B_pad - B), (0, 0)))

    # Pre-scale i/f/o gate columns by 0.5 (PyTorch gate order i,f,g,o) so the
    # kernel needs a single tanh per step; exact in bf16 (power of two).
    gate_scale = jnp.concatenate([
        jnp.full((H,), 0.5, jnp.float32), jnp.full((H,), 0.5, jnp.float32),
        jnp.ones((H,), jnp.float32), jnp.full((H,), 0.5, jnp.float32)])
    wih_t = (wih.astype(jnp.float32).T * gate_scale[None, :]).astype(jnp.bfloat16)
    whh_t = (whh.astype(jnp.float32).T * gate_scale[None, :]).astype(jnp.bfloat16)
    bias = ((b_ih + b_hh).astype(jnp.float32) * gate_scale).reshape(1, 4 * H)

    # Lane-dense classifier head: FC1 width 50 -> 128, logits L -> L_pad.
    w1_t = jnp.zeros((H, F1_pad), jnp.float32).at[:, :F1].set(
        w1.astype(jnp.float32).T)
    b1_2d = jnp.zeros((1, F1_pad), jnp.float32).at[:, :F1].set(
        b1.astype(jnp.float32).reshape(1, -1))
    w2_t = jnp.zeros((F1_pad, L_pad), jnp.float32).at[:F1, :L].set(
        w2.astype(jnp.float32).T)
    b2_2d = jnp.zeros((1, L_pad), jnp.float32).at[:, :L].set(
        b2.astype(jnp.float32).reshape(1, -1))

    weights = (wih_t, whh_t, bias, w1_t, b1_2d, w2_t, b2_2d)

    def full_spec(a):
        nd = a.ndim
        return pl.BlockSpec(a.shape, lambda b, _nd=nd: (0,) * _nd)

    in_specs = ([pl.BlockSpec((S, TB, E), lambda b: (0, b, 0))]
                + [full_spec(a) for a in weights])
    out_specs = pl.BlockSpec((TB, L_pad), lambda b: (b, 0))

    # Explicit VMEM budget: xw scratch + double-buffered x tile + weights + out.
    xw_bytes = S * TB * 4 * H * 4
    x_bytes = 2 * S * TB * E * 2
    w_bytes = 2 * sum(int(a.size) * a.dtype.itemsize for a in weights)
    out_bytes = 2 * TB * L_pad * 4
    vmem_limit = int(min(max(2 * (xw_bytes + x_bytes + w_bytes + out_bytes),
                             32 * 1024 * 1024), 64 * 1024 * 1024))

    out_padded = pl.pallas_call(
        lstm_classifier_kernel,
        out_shape=jax.ShapeDtypeStruct((B_pad, L_pad), jnp.float32),
        grid=(B_pad // TB,),
        in_specs=in_specs,
        out_specs=out_specs,
        scratch_shapes=[pltpu.VMEM((S * TB, 4 * H), jnp.float32)],
        compiler_params=pltpu.CompilerParams(
            dimension_semantics=("parallel",),   # shard batch tiles on v7x's 2 TCs
            vmem_limit_bytes=vmem_limit),
    )(x_emb, *weights)

    return out_padded[:B, :L]


def _reference_forward(x_tokens, emb_matrix, wih, whh, b_ih, b_hh,
                       w1, b1, w2, b2):
    # Pure-JAX reference of the PyTorch forward, with matmul operands cast to
    # bf16 (matching the kernel's bf16 MXU path); state/activations in f32.
    x = jnp.take(emb_matrix, x_tokens.T, axis=0).astype(jnp.bfloat16).astype(jnp.float32)
    wih_f = wih.astype(jnp.bfloat16).astype(jnp.float32)
    whh_f = whh.astype(jnp.bfloat16).astype(jnp.float32)
    S, B, _ = x.shape
    H = whh.shape[1]
    bias = (b_ih + b_hh).astype(jnp.float32)
    h = jnp.zeros((B, H), jnp.float32)
    c = jnp.zeros((B, H), jnp.float32)
    for t in range(S):
        hb = h.astype(jnp.bfloat16).astype(jnp.float32)
        z = x[t] @ wih_f.T + hb @ whh_f.T + bias
        i_g = jax.nn.sigmoid(z[:, 0 * H:1 * H])
        f_g = jax.nn.sigmoid(z[:, 1 * H:2 * H])
        g_g = jnp.tanh(z[:, 2 * H:3 * H])
        o_g = jax.nn.sigmoid(z[:, 3 * H:4 * H])
        c = f_g * c + i_g * g_g
        h = o_g * jnp.tanh(c)
    hid = jnp.maximum(c @ w1.astype(jnp.float32).T + b1.astype(jnp.float32), 0.0)
    return hid @ w2.astype(jnp.float32).T + b2.astype(jnp.float32)


if __name__ == "__main__":
    # Small, module-consistent shapes.
    dict_length = 20
    emb_size = 32               # -> hidden_dims defaults to emb_size
    hidden = emb_size
    label_len = 13
    batch, seq = 2, 8

    key = jax.random.PRNGKey(0)
    ks = jax.random.split(key, 10)

    emb_matrix = jax.random.normal(ks[0], (1 + dict_length, emb_size), jnp.float32)

    s_lstm = 1.0 / float(hidden) ** 0.5
    wih = jax.random.uniform(ks[1], (4 * hidden, emb_size), jnp.float32, -s_lstm, s_lstm)
    whh = jax.random.uniform(ks[2], (4 * hidden, hidden), jnp.float32, -s_lstm, s_lstm)
    b_ih = jax.random.uniform(ks[3], (4 * hidden,), jnp.float32, -s_lstm, s_lstm)
    b_hh = jax.random.uniform(ks[4], (4 * hidden,), jnp.float32, -s_lstm, s_lstm)

    s_fc1 = 1.0 / float(hidden) ** 0.5
    w1 = jax.random.uniform(ks[5], (50, hidden), jnp.float32, -s_fc1, s_fc1)
    b1 = jax.random.uniform(ks[6], (50,), jnp.float32, -s_fc1, s_fc1)
    s_fc2 = 1.0 / 50.0 ** 0.5
    w2 = jax.random.uniform(ks[7], (label_len, 50), jnp.float32, -s_fc2, s_fc2)
    b2 = jax.random.uniform(ks[8], (label_len,), jnp.float32, -s_fc2, s_fc2)

    x_tokens = jax.random.randint(ks[9], (batch, seq), 0, 1 + dict_length, jnp.int32)

    logits = lstm_classifier_forward(x_tokens, emb_matrix,
                                     wih, whh, b_ih, b_hh, w1, b1, w2, b2)
    jax.block_until_ready(logits)
    assert logits.shape == (batch, label_len)
    assert logits.dtype == jnp.float32

    ref = _reference_forward(x_tokens, emb_matrix, wih, whh, b_ih, b_hh,
                             w1, b1, w2, b2)
    max_err = float(jnp.max(jnp.abs(logits - ref)))
    assert max_err < 2e-2, f"kernel vs reference max abs err {max_err}"

    print("KERNEL_OK")
</pallas_src>

<mosaic_0001>
module attributes {stable_mosaic.version = 11 : i64} {
  func.func @lstm_classifier_kernel(%arg0: i32, %arg1: memref<8x8x32xbf16, #tpu.memory_space<vmem>>, %arg2: memref<32x128xbf16, #tpu.memory_space<vmem>>, %arg3: memref<32x128xbf16, #tpu.memory_space<vmem>>, %arg4: memref<1x128xf32, #tpu.memory_space<vmem>>, %arg5: memref<32x128xf32, #tpu.memory_space<vmem>>, %arg6: memref<1x128xf32, #tpu.memory_space<vmem>>, %arg7: memref<128x128xf32, #tpu.memory_space<vmem>>, %arg8: memref<1x128xf32, #tpu.memory_space<vmem>>, %arg9: memref<8x128xf32, #tpu.memory_space<vmem>>, %arg10: memref<64x128xf32, #tpu.memory_space<vmem>>) attributes {dimension_semantics = [#tpu.dimension_semantics<parallel>], iteration_bounds = array<i64: 1>, scalar_prefetch = 0 : i64, scratch_operands = 1 : i64, tpu.core_type = #tpu.core_type<tc>, window_params = [{transform_indices = @transform_0, window_bounds = array<i64: 8, 8, 32>}, {pipeline_mode = #tpu.pipeline_mode<synchronous>, transform_indices = @transform_1, window_bounds = array<i64: 32, 128>}, {pipeline_mode = #tpu.pipeline_mode<synchronous>, transform_indices = @transform_2, window_bounds = array<i64: 32, 128>}, {pipeline_mode = #tpu.pipeline_mode<synchronous>, transform_indices = @transform_3, window_bounds = array<i64: 1, 128>}, {pipeline_mode = #tpu.pipeline_mode<synchronous>, transform_indices = @transform_4, window_bounds = array<i64: 32, 128>}, {pipeline_mode = #tpu.pipeline_mode<synchronous>, transform_indices = @transform_5, window_bounds = array<i64: 1, 128>}, {pipeline_mode = #tpu.pipeline_mode<synchronous>, transform_indices = @transform_6, window_bounds = array<i64: 128, 128>}, {pipeline_mode = #tpu.pipeline_mode<synchronous>, transform_indices = @transform_7, window_bounds = array<i64: 1, 128>}, {transform_indices = @transform_8, window_bounds = array<i64: 8, 128>}]} {
    %c0 = arith.constant 0 : index
    %c0_0 = arith.constant 0 : index
    %0 = vector.load %arg3[%c0, %c0_0] : memref<32x128xbf16, #tpu.memory_space<vmem>>, vector<32x128xbf16>
    %c0_1 = arith.constant 0 : index
    %c0_2 = arith.constant 0 : index
    %c0_3 = arith.constant 0 : index
    %1 = vector.load %arg1[%c0_1, %c0_2, %c0_3] : memref<8x8x32xbf16, #tpu.memory_space<vmem>>, vector<8x8x32xbf16>
    %2 = vector.shape_cast %1 : vector<8x8x32xbf16> to vector<64x32xbf16>
    %c0_4 = arith.constant 0 : index
    %c0_5 = arith.constant 0 : index
    %3 = vector.load %arg2[%c0_4, %c0_5] : memref<32x128xbf16, #tpu.memory_space<vmem>>, vector<32x128xbf16>
    %cst = arith.constant dense<0.000000e+00> : vector<64x128xf32>
    %4 = tpu.matmul %2, %3, %cst {dimension_numbers = #tpu.dot_dimension_numbers<[1], [0], [0], [1], [0, 0, 1, 1], [], []>} : vector<64x32xbf16>, vector<32x128xbf16>, vector<64x128xf32> -> vector<64x128xf32>
    %c0_6 = arith.constant 0 : index
    %c0_7 = arith.constant 0 : index
    %5 = vector.load %arg4[%c0_6, %c0_7] : memref<1x128xf32, #tpu.memory_space<vmem>>, vector<1x128xf32>
    %6 = vector.broadcast %5 : vector<1x128xf32> to vector<64x128xf32>
    %7 = arith.addf %4, %6 : vector<64x128xf32>
    %c0_8 = arith.constant 0 : index
    %c0_9 = arith.constant 0 : index
    %8 = vector.load %arg10[%c0_8, %c0_9] : memref<64x128xf32, #tpu.memory_space<vmem>>, vector<64x128xf32>
    tpu.vector_store %arg10[%c0_8, %c0_9], %7 {strides = array<i32>} : memref<64x128xf32, #tpu.memory_space<vmem>>, vector<64x128xf32>,
    %cst_10 = arith.constant 0.000000e+00 : f32
    %9 = vector.broadcast %cst_10 : f32 to vector<8x32xf32>
    %cst_11 = arith.constant 0.000000e+00 : f32
    %10 = vector.broadcast %cst_11 : f32 to vector<8x32xf32>
    %c0_12 = arith.constant 0 : index
    %c0_13 = arith.constant 0 : index
    %11 = vector.load %arg10[%c0_12, %c0_13] : memref<64x128xf32, #tpu.memory_space<vmem>>, vector<8x128xf32>
    %12 = arith.truncf %9 : vector<8x32xf32> to vector<8x32xbf16>
    %cst_14 = arith.constant dense<0.000000e+00> : vector<8x128xf32>
    %13 = tpu.matmul %12, %0, %cst_14 {dimension_numbers = #tpu.dot_dimension_numbers<[1], [0], [0], [1], [0, 0, 1, 1], [], []>} : vector<8x32xbf16>, vector<32x128xbf16>, vector<8x128xf32> -> vector<8x128xf32>
    %14 = arith.addf %11, %13 : vector<8x128xf32>
    %15 = math.tanh %14 : vector<8x128xf32>
    %cst_15 = arith.constant 5.000000e-01 : f32
    %16 = vector.broadcast %cst_15 : f32 to vector<8x128xf32>
    %17 = arith.mulf %16, %15 : vector<8x128xf32>
    %cst_16 = arith.constant 5.000000e-01 : f32
    %18 = vector.broadcast %cst_16 : f32 to vector<8x128xf32>
    %19 = arith.addf %17, %18 : vector<8x128xf32>
    %20 = vector.extract_strided_slice %19 {offsets = [0, 0], sizes = [8, 32], strides = [1, 1]} : vector<8x128xf32> to vector<8x32xf32>
    %21 = vector.extract_strided_slice %19 {offsets = [0, 32], sizes = [8, 32], strides = [1, 1]} : vector<8x128xf32> to vector<8x32xf32>
    %22 = vector.extract_strided_slice %15 {offsets = [0, 64], sizes = [8, 32], strides = [1, 1]} : vector<8x128xf32> to vector<8x32xf32>
    %23 = vector.extract_strided_slice %19 {offsets = [0, 96], sizes = [8, 32], strides = [1, 1]} : vector<8x128xf32> to vector<8x32xf32>
    %24 = arith.mulf %21, %10 : vector<8x32xf32>
    %25 = arith.mulf %20, %22 : vector<8x32xf32>
    %26 = arith.addf %24, %25 : vector<8x32xf32>
    %27 = math.tanh %26 : vector<8x32xf32>
    %28 = arith.mulf %23, %27 : vector<8x32xf32>
    %c8 = arith.constant 8 : index
    %c0_17 = arith.constant 0 : index
    %29 = vector.load %arg10[%c8, %c0_17] : memref<64x128xf32, #tpu.memory_space<vmem>>, vector<8x128xf32>
    %30 = arith.truncf %28 : vector<8x32xf32> to vector<8x32xbf16>
    %cst_18 = arith.constant dense<0.000000e+00> : vector<8x128xf32>
    %31 = tpu.matmul %30, %0, %cst_18 {dimension_numbers = #tpu.dot_dimension_numbers<[1], [0], [0], [1], [0, 0, 1, 1], [], []>} : vector<8x32xbf16>, vector<32x128xbf16>, vector<8x128xf32> -> vector<8x128xf32>
    %32 = arith.addf %29, %31 : vector<8x128xf32>
    %33 = math.tanh %32 : vector<8x128xf32>
    %cst_19 = arith.constant 5.000000e-01 : f32
    %34 = vector.broadcast %cst_19 : f32 to vector<8x128xf32>
    %35 = arith.mulf %34, %33 : vector<8x128xf32>
    %cst_20 = arith.constant 5.000000e-01 : f32
    %36 = vector.broadcast %cst_20 : f32 to vector<8x128xf32>
    %37 = arith.addf %35, %36 : vector<8x128xf32>
    %38 = vector.extract_strided_slice %37 {offsets = [0, 0], sizes = [8, 32], strides = [1, 1]} : vector<8x128xf32> to vector<8x32xf32>
    %39 = vector.extract_strided_slice %37 {offsets = [0, 32], sizes = [8, 32], strides = [1, 1]} : vector<8x128xf32> to vector<8x32xf32>
    %40 = vector.extract_strided_slice %33 {offsets = [0, 64], sizes = [8, 32], strides = [1, 1]} : vector<8x128xf32> to vector<8x32xf32>
    %41 = vector.extract_strided_slice %37 {offsets = [0, 96], sizes = [8, 32], strides = [1, 1]} : vector<8x128xf32> to vector<8x32xf32>
    %42 = arith.mulf %39, %26 : vector<8x32xf32>
    %43 = arith.mulf %38, %40 : vector<8x32xf32>
    %44 = arith.addf %42, %43 : vector<8x32xf32>
    %45 = math.tanh %44 : vector<8x32xf32>
    %46 = arith.mulf %41, %45 : vector<8x32xf32>
    %c16 = arith.constant 16 : index
    %c0_21 = arith.constant 0 : index
    %47 = vector.load %arg10[%c16, %c0_21] : memref<64x128xf32, #tpu.memory_space<vmem>>, vector<8x128xf32>
    %48 = arith.truncf %46 : vector<8x32xf32> to vector<8x32xbf16>
    %cst_22 = arith.constant dense<0.000000e+00> : vector<8x128xf32>
    %49 = tpu.matmul %48, %0, %cst_22 {dimension_numbers = #tpu.dot_dimension_numbers<[1], [0], [0], [1], [0, 0, 1, 1], [], []>} : vector<8x32xbf16>, vector<32x128xbf16>, vector<8x128xf32> -> vector<8x128xf32>
    %50 = arith.addf %47, %49 : vector<8x128xf32>
    %51 = math.tanh %50 : vector<8x128xf32>
    %cst_23 = arith.constant 5.000000e-01 : f32
    %52 = vector.broadcast %cst_23 : f32 to vector<8x128xf32>
    %53 = arith.mulf %52, %51 : vector<8x128xf32>
    %cst_24 = arith.constant 5.000000e-01 : f32
    %54 = vector.broadcast %cst_24 : f32 to vector<8x128xf32>
    %55 = arith.addf %53, %54 : vector<8x128xf32>
    %56 = vector.extract_strided_slice %55 {offsets = [0, 0], sizes = [8, 32], strides = [1, 1]} : vector<8x128xf32> to vector<8x32xf32>
    %57 = vector.extract_strided_slice %55 {offsets = [0, 32], sizes = [8, 32], strides = [1, 1]} : vector<8x128xf32> to vector<8x32xf32>
    %58 = vector.extract_strided_slice %51 {offsets = [0, 64], sizes = [8, 32], strides = [1, 1]} : vector<8x128xf32> to vector<8x32xf32>
    %59 = vector.extract_strided_slice %55 {offsets = [0, 96], sizes = [8, 32], strides = [1, 1]} : vector<8x128xf32> to vector<8x32xf32>
    %60 = arith.mulf %57, %44 : vector<8x32xf32>
    %61 = arith.mulf %56, %58 : vector<8x32xf32>
    %62 = arith.addf %60, %61 : vector<8x32xf32>
    %63 = math.tanh %62 : vector<8x32xf32>
    %64 = arith.mulf %59, %63 : vector<8x32xf32>
    %c24 = arith.constant 24 : index
    %c0_25 = arith.constant 0 : index
    %65 = vector.load %arg10[%c24, %c0_25] : memref<64x128xf32, #tpu.memory_space<vmem>>, vector<8x128xf32>
    %66 = arith.truncf %64 : vector<8x32xf32> to vector<8x32xbf16>
    %cst_26 = arith.constant dense<0.000000e+00> : vector<8x128xf32>
    %67 = tpu.matmul %66, %0, %cst_26 {dimension_numbers = #tpu.dot_dimension_numbers<[1], [0], [0], [1], [0, 0, 1, 1], [], []>} : vector<8x32xbf16>, vector<32x128xbf16>, vector<8x128xf32> -> vector<8x128xf32>
    %68 = arith.addf %65, %67 : vector<8x128xf32>
    %69 = math.tanh %68 : vector<8x128xf32>
    %cst_27 = arith.constant 5.000000e-01 : f32
    %70 = vector.broadcast %cst_27 : f32 to vector<8x128xf32>
    %71 = arith.mulf %70, %69 : vector<8x128xf32>
    %cst_28 = arith.constant 5.000000e-01 : f32
    %72 = vector.broadcast %cst_28 : f32 to vector<8x128xf32>
    %73 = arith.addf %71, %72 : vector<8x128xf32>
    %74 = vector.extract_strided_slice %73 {offsets = [0, 0], sizes = [8, 32], strides = [1, 1]} : vector<8x128xf32> to vector<8x32xf32>
    %75 = vector.extract_strided_slice %73 {offsets = [0, 32], sizes = [8, 32], strides = [1, 1]} : vector<8x128xf32> to vector<8x32xf32>
    %76 = vector.extract_strided_slice %69 {offsets = [0, 64], sizes = [8, 32], strides = [1, 1]} : vector<8x128xf32> to vector<8x32xf32>
    %77 = vector.extract_strided_slice %73 {offsets = [0, 96], sizes = [8, 32], strides = [1, 1]} : vector<8x128xf32> to vector<8x32xf32>
    %78 = arith.mulf %75, %62 : vector<8x32xf32>
    %79 = arith.mulf %74, %76 : vector<8x32xf32>
    %80 = arith.addf %78, %79 : vector<8x32xf32>
    %81 = math.tanh %80 : vector<8x32xf32>
    %82 = arith.mulf %77, %81 : vector<8x32xf32>
    %c32 = arith.constant 32 : index
    %c0_29 = arith.constant 0 : index
    %83 = vector.load %arg10[%c32, %c0_29] : memref<64x128xf32, #tpu.memory_space<vmem>>, vector<8x128xf32>
    %84 = arith.truncf %82 : vector<8x32xf32> to vector<8x32xbf16>
    %cst_30 = arith.constant dense<0.000000e+00> : vector<8x128xf32>
    %85 = tpu.matmul %84, %0, %cst_30 {dimension_numbers = #tpu.dot_dimension_numbers<[1], [0], [0], [1], [0, 0, 1, 1], [], []>} : vector<8x32xbf16>, vector<32x128xbf16>, vector<8x128xf32> -> vector<8x128xf32>
    %86 = arith.addf %83, %85 : vector<8x128xf32>
    %87 = math.tanh %86 : vector<8x128xf32>
    %cst_31 = arith.constant 5.000000e-01 : f32
    %88 = vector.broadcast %cst_31 : f32 to vector<8x128xf32>
    %89 = arith.mulf %88, %87 : vector<8x128xf32>
    %cst_32 = arith.constant 5.000000e-01 : f32
    %90 = vector.broadcast %cst_32 : f32 to vector<8x128xf32>
    %91 = arith.addf %89, %90 : vector<8x128xf32>
    %92 = vector.extract_strided_slice %91 {offsets = [0, 0], sizes = [8, 32], strides = [1, 1]} : vector<8x128xf32> to vector<8x32xf32>
    %93 = vector.extract_strided_slice %91 {offsets = [0, 32], sizes = [8, 32], strides = [1, 1]} : vector<8x128xf32> to vector<8x32xf32>
    %94 = vector.extract_strided_slice %87 {offsets = [0, 64], sizes = [8, 32], strides = [1, 1]} : vector<8x128xf32> to vector<8x32xf32>
    %95 = vector.extract_strided_slice %91 {offsets = [0, 96], sizes = [8, 32], strides = [1, 1]} : vector<8x128xf32> to vector<8x32xf32>
    %96 = arith.mulf %93, %80 : vector<8x32xf32>
    %97 = arith.mulf %92, %94 : vector<8x32xf32>
    %98 = arith.addf %96, %97 : vector<8x32xf32>
    %99 = math.tanh %98 : vector<8x32xf32>
    %100 = arith.mulf %95, %99 : vector<8x32xf32>
    %c40 = arith.constant 40 : index
    %c0_33 = arith.constant 0 : index
    %101 = vector.load %arg10[%c40, %c0_33] : memref<64x128xf32, #tpu.memory_space<vmem>>, vector<8x128xf32>
    %102 = arith.truncf %100 : vector<8x32xf32> to vector<8x32xbf16>
    %cst_34 = arith.constant dense<0.000000e+00> : vector<8x128xf32>
    %103 = tpu.matmul %102, %0, %cst_34 {dimension_numbers = #tpu.dot_dimension_numbers<[1], [0], [0], [1], [0, 0, 1, 1], [], []>} : vector<8x32xbf16>, vector<32x128xbf16>, vector<8x128xf32> -> vector<8x128xf32>
    %104 = arith.addf %101, %103 : vector<8x128xf32>
    %105 = math.tanh %104 : vector<8x128xf32>
    %cst_35 = arith.constant 5.000000e-01 : f32
    %106 = vector.broadcast %cst_35 : f32 to vector<8x128xf32>
    %107 = arith.mulf %106, %105 : vector<8x128xf32>
    %cst_36 = arith.constant 5.000000e-01 : f32
    %108 = vector.broadcast %cst_36 : f32 to vector<8x128xf32>
    %109 = arith.addf %107, %108 : vector<8x128xf32>
    %110 = vector.extract_strided_slice %109 {offsets = [0, 0], sizes = [8, 32], strides = [1, 1]} : vector<8x128xf32> to vector<8x32xf32>
    %111 = vector.extract_strided_slice %109 {offsets = [0, 32], sizes = [8, 32], strides = [1, 1]} : vector<8x128xf32> to vector<8x32xf32>
    %112 = vector.extract_strided_slice %105 {offsets = [0, 64], sizes = [8, 32], strides = [1, 1]} : vector<8x128xf32> to vector<8x32xf32>
    %113 = vector.extract_strided_slice %109 {offsets = [0, 96], sizes = [8, 32], strides = [1, 1]} : vector<8x128xf32> to vector<8x32xf32>
    %114 = arith.mulf %111, %98 : vector<8x32xf32>
    %115 = arith.mulf %110, %112 : vector<8x32xf32>
    %116 = arith.addf %114, %115 : vector<8x32xf32>
    %117 = math.tanh %116 : vector<8x32xf32>
    %118 = arith.mulf %113, %117 : vector<8x32xf32>
    %c48 = arith.constant 48 : index
    %c0_37 = arith.constant 0 : index
    %119 = vector.load %arg10[%c48, %c0_37] : memref<64x128xf32, #tpu.memory_space<vmem>>, vector<8x128xf32>
    %120 = arith.truncf %118 : vector<8x32xf32> to vector<8x32xbf16>
    %cst_38 = arith.constant dense<0.000000e+00> : vector<8x128xf32>
    %121 = tpu.matmul %120, %0, %cst_38 {dimension_numbers = #tpu.dot_dimension_numbers<[1], [0], [0], [1], [0, 0, 1, 1], [], []>} : vector<8x32xbf16>, vector<32x128xbf16>, vector<8x128xf32> -> vector<8x128xf32>
    %122 = arith.addf %119, %121 : vector<8x128xf32>
    %123 = math.tanh %122 : vector<8x128xf32>
    %cst_39 = arith.constant 5.000000e-01 : f32
    %124 = vector.broadcast %cst_39 : f32 to vector<8x128xf32>
    %125 = arith.mulf %124, %123 : vector<8x128xf32>
    %cst_40 = arith.constant 5.000000e-01 : f32
    %126 = vector.broadcast %cst_40 : f32 to vector<8x128xf32>
    %127 = arith.addf %125, %126 : vector<8x128xf32>
    %128 = vector.extract_strided_slice %127 {offsets = [0, 0], sizes = [8, 32], strides = [1, 1]} : vector<8x128xf32> to vector<8x32xf32>
    %129 = vector.extract_strided_slice %127 {offsets = [0, 32], sizes = [8, 32], strides = [1, 1]} : vector<8x128xf32> to vector<8x32xf32>
    %130 = vector.extract_strided_slice %123 {offsets = [0, 64], sizes = [8, 32], strides = [1, 1]} : vector<8x128xf32> to vector<8x32xf32>
    %131 = vector.extract_strided_slice %127 {offsets = [0, 96], sizes = [8, 32], strides = [1, 1]} : vector<8x128xf32> to vector<8x32xf32>
    %132 = arith.mulf %129, %116 : vector<8x32xf32>
    %133 = arith.mulf %128, %130 : vector<8x32xf32>
    %134 = arith.addf %132, %133 : vector<8x32xf32>
    %135 = math.tanh %134 : vector<8x32xf32>
    %136 = arith.mulf %131, %135 : vector<8x32xf32>
    %c56 = arith.constant 56 : index
    %c0_41 = arith.constant 0 : index
    %137 = vector.load %arg10[%c56, %c0_41] : memref<64x128xf32, #tpu.memory_space<vmem>>, vector<8x128xf32>
    %138 = arith.truncf %136 : vector<8x32xf32> to vector<8x32xbf16>
    %cst_42 = arith.constant dense<0.000000e+00> : vector<8x128xf32>
    %139 = tpu.matmul %138, %0, %cst_42 {dimension_numbers = #tpu.dot_dimension_numbers<[1], [0], [0], [1], [0, 0, 1, 1], [], []>} : vector<8x32xbf16>, vector<32x128xbf16>, vector<8x128xf32> -> vector<8x128xf32>
    %140 = arith.addf %137, %139 : vector<8x128xf32>
    %141 = math.tanh %140 : vector<8x128xf32>
    %cst_43 = arith.constant 5.000000e-01 : f32
    %142 = vector.broadcast %cst_43 : f32 to vector<8x128xf32>
    %143 = arith.mulf %142, %141 : vector<8x128xf32>
    %cst_44 = arith.constant 5.000000e-01 : f32
    %144 = vector.broadcast %cst_44 : f32 to vector<8x128xf32>
    %145 = arith.addf %143, %144 : vector<8x128xf32>
    %146 = vector.extract_strided_slice %145 {offsets = [0, 0], sizes = [8, 32], strides = [1, 1]} : vector<8x128xf32> to vector<8x32xf32>
    %147 = vector.extract_strided_slice %145 {offsets = [0, 32], sizes = [8, 32], strides = [1, 1]} : vector<8x128xf32> to vector<8x32xf32>
    %148 = vector.extract_strided_slice %141 {offsets = [0, 64], sizes = [8, 32], strides = [1, 1]} : vector<8x128xf32> to vector<8x32xf32>
    %149 = arith.mulf %147, %134 : vector<8x32xf32>
    %150 = arith.mulf %146, %148 : vector<8x32xf32>
    %151 = arith.addf %149, %150 : vector<8x32xf32>
    %c0_45 = arith.constant 0 : index
    %c0_46 = arith.constant 0 : index
    %152 = vector.load %arg5[%c0_45, %c0_46] : memref<32x128xf32, #tpu.memory_space<vmem>>, vector<32x128xf32>
    %cst_47 = arith.constant dense<0.000000e+00> : vector<8x128xf32>
    %153 = tpu.matmul %151, %152, %cst_47 {dimension_numbers = #tpu.dot_dimension_numbers<[1], [0], [0], [1], [0, 0, 1, 1], [], []>} : vector<8x32xf32>, vector<32x128xf32>, vector<8x128xf32> -> vector<8x128xf32>
    %c0_48 = arith.constant 0 : index
    %c0_49 = arith.constant 0 : index
    %154 = vector.load %arg6[%c0_48, %c0_49] : memref<1x128xf32, #tpu.memory_space<vmem>>, vector<1x128xf32>
    %155 = vector.broadcast %154 : vector<1x128xf32> to vector<8x128xf32>
    %156 = arith.addf %153, %155 : vector<8x128xf32>
    %cst_50 = arith.constant 0.000000e+00 : f32
    %157 = vector.broadcast %cst_50 : f32 to vector<8x128xf32>
    %158 = arith.maximumf %156, %157 : vector<8x128xf32>
    %c0_51 = arith.constant 0 : index
    %c0_52 = arith.constant 0 : index
    %159 = vector.load %arg7[%c0_51, %c0_52] : memref<128x128xf32, #tpu.memory_space<vmem>>, vector<128x128xf32>
    %cst_53 = arith.constant dense<0.000000e+00> : vector<8x128xf32>
    %160 = tpu.matmul %158, %159, %cst_53 {dimension_numbers = #tpu.dot_dimension_numbers<[1], [0], [0], [1], [0, 0, 1, 1], [], []>} : vector<8x128xf32>, vector<128x128xf32>, vector<8x128xf32> -> vector<8x128xf32>
    %c0_54 = arith.constant 0 : index
    %c0_55 = arith.constant 0 : index
    %161 = vector.load %arg8[%c0_54, %c0_55] : memref<1x128xf32, #tpu.memory_space<vmem>>, vector<1x128xf32>
    %162 = vector.broadcast %161 : vector<1x128xf32> to vector<8x128xf32>
    %163 = arith.addf %160, %162 : vector<8x128xf32>
    %c0_56 = arith.constant 0 : index
    %c0_57 = arith.constant 0 : index
    %164 = vector.load %arg9[%c0_56, %c0_57] : memref<8x128xf32, #tpu.memory_space<vmem>>, vector<8x128xf32>
    tpu.vector_store %arg9[%c0_56, %c0_57], %163 {strides = array<i32>} : memref<8x128xf32, #tpu.memory_space<vmem>>, vector<8x128xf32>,
    return
  }
  func.func @transform_0(%arg0: i32) -> (i32, i32, i32) {
    %c0_i32 = arith.constant 0 : i32
    %c0_i32_0 = arith.constant 0 : i32
    %c0_i32_1 = arith.constant 0 : i32
    return %c0_i32, %arg0, %c0_i32_0 : i32, i32, i32
  }
  func.func @transform_1(%arg0: i32) -> (i32, i32) {
    %c0_i32 = arith.constant 0 : i32
    %c0_i32_0 = arith.constant 0 : i32
    %c0_i32_1 = arith.constant 0 : i32
    return %c0_i32, %c0_i32_0 : i32, i32
  }
  func.func @transform_2(%arg0: i32) -> (i32, i32) {
    %c0_i32 = arith.constant 0 : i32
    %c0_i32_0 = arith.constant 0 : i32
    %c0_i32_1 = arith.constant 0 : i32
    return %c0_i32, %c0_i32_0 : i32, i32
  }
  func.func @transform_3(%arg0: i32) -> (i32, i32) {
    %c0_i32 = arith.constant 0 : i32
    %c0_i32_0 = arith.constant 0 : i32
    %c0_i32_1 = arith.constant 0 : i32
    return %c0_i32, %c0_i32_0 : i32, i32
  }
  func.func @transform_4(%arg0: i32) -> (i32, i32) {
    %c0_i32 = arith.constant 0 : i32
    %c0_i32_0 = arith.constant 0 : i32
    %c0_i32_1 = arith.constant 0 : i32
    return %c0_i32, %c0_i32_0 : i32, i32
  }
  func.func @transform_5(%arg0: i32) -> (i32, i32) {
    %c0_i32 = arith.constant 0 : i32
    %c0_i32_0 = arith.constant 0 : i32
    %c0_i32_1 = arith.constant 0 : i32
    return %c0_i32, %c0_i32_0 : i32, i32
  }
  func.func @transform_6(%arg0: i32) -> (i32, i32) {
    %c0_i32 = arith.constant 0 : i32
    %c0_i32_0 = arith.constant 0 : i32
    %c0_i32_1 = arith.constant 0 : i32
    return %c0_i32, %c0_i32_0 : i32, i32
  }
  func.func @transform_7(%arg0: i32) -> (i32, i32) {
    %c0_i32 = arith.constant 0 : i32
    %c0_i32_0 = arith.constant 0 : i32
    %c0_i32_1 = arith.constant 0 : i32
    return %c0_i32, %c0_i32_0 : i32, i32
  }
  func.func @transform_8(%arg0: i32) -> (i32, i32) {
    %c0_i32 = arith.constant 0 : i32
    %c0_i32_0 = arith.constant 0 : i32
    return %arg0, %c0_i32 : i32, i32
  }
}

</mosaic_0001>

<llo_original>
// kernel: tpu_custom_call.1
$region0: #{tpu_custom_call.1}
  #allocation0 [shape = 'u32[]', space=smem, size = 0x4, offset = 0x4, fixed_abs, tag = 'smem constant byte address 0x4 - core index']
  #allocation1 [shape = 'u32[144,128]{1,0:T(1,128)}', space=vmem, size = 0x12000, scoped, tag = 'internal scratch']
  #allocation2 [shape = 'f32[64,128]{1,0:T(8,128)}', space=vmem, size = 0x8000, scoped, tag = 'scratch operand']
  %s0 = inlined_call_operand.hbm [shape: bf16[8,8,32], index: 0, kind: input, shape index: {}]
  %s1 = inlined_call_operand.hbm [shape: bf16[32,128], index: 1, kind: input, shape index: {}]
  %s2 = inlined_call_operand.hbm [shape: bf16[32,128], index: 2, kind: input, shape index: {}]
  %s3 = inlined_call_operand.vmem [shape: f32[1,128], index: 3, kind: input, shape index: {}]
  %s4 = inlined_call_operand.hbm [shape: f32[32,128], index: 4, kind: input, shape index: {}]
  %s5 = inlined_call_operand.vmem [shape: f32[1,128], index: 5, kind: input, shape index: {}]
  %s6 = inlined_call_operand.hbm [shape: f32[128,128], index: 6, kind: input, shape index: {}]
  %s7 = inlined_call_operand.vmem [shape: f32[1,128], index: 7, kind: input, shape index: {}]
  %s8 = inlined_call_operand.hbm [shape: f32[8,128], index: 8, kind: output, shape index: {}]
  %s9 = sld [smem:[#allocation0]]
  $region62: #{tpu_custom_call.1} parent=0
    _
  %s11 = ssub.s32 1, %s9
  %s12 = scalar_select 0, %s11, %s9
  $region1: #{tpu_custom_call.1} parent=0
    #allocation3 [shape = 'u8[16384]{0}', space=vmem, size = 0x4000, scoped, tag = 'input window, operand 0, single buffered']
    #allocation4 [shape = 's32[1]{0}', space=sflag, size = 0x4, scoped, tag = 'scoped memory for tpu_custom_call.1']
    #allocation5 [shape = 's32[1]{0}', space=sflag, size = 0x4, scoped, tag = 'scoped memory for tpu_custom_call.1']
    #allocation6 [shape = 'u8[8192]{0}', space=vmem, size = 0x2000, scoped, tag = 'input window, operand 1, single buffered']
    #allocation7 [shape = 's32[1]{0}', space=sflag, size = 0x4, scoped, tag = 'scoped memory for tpu_custom_call.1']
    #allocation8 [shape = 'u8[8192]{0}', space=vmem, size = 0x2000, scoped, tag = 'input window, operand 2, single buffered']
    #allocation9 [shape = 'u8[16384]{0}', space=vmem, size = 0x4000, scoped, tag = 'input window, operand 4, single buffered']
    #allocation10 [shape = 's32[1]{0}', space=sflag, size = 0x4, scoped, tag = 'scoped memory for tpu_custom_call.1']
    #allocation11 [shape = 'u8[65536]{0}', space=vmem, size = 0x10000, scoped, tag = 'input window, operand 6, single buffered']
    #allocation12 [shape = 'u8[4096]{0}', space=vmem, size = 0x1000, scoped, tag = 'output window, operand 0, single buffered']
    %13 = vsyncpa [#allocation4], 0
    %14 = vsyncpa [#allocation7], 0
    %15 = vsyncpa [#allocation10], 0
    %16 = vsyncpa [#allocation5], 0
    // Predicated region
    $region2: #{tpu_custom_call.1} parent=1 // pred_check
      _
    $region3: #{tpu_custom_call.1} parent=1 // pred_check_branch
      %18 = sbr.rel (0) target = $region5
    $region4: #{tpu_custom_call.1} parent=1 // pred_region
      %s20 = ssub.s32 512, 512
      %21 = vsyncadd [#allocation4], %s20
      %s22 = sshll.u32 [#allocation3], 4
      %s23 = int_to_ptr.vmem [resolvable:$true] %s22
      %28 = dma.hbm_to_vmem [thread:$0]  %s0, 512, %s23, [#allocation4], 64, 64, 4
    $region5: #{tpu_custom_call.1} parent=1 // pred_fallthru
      _
    // Predicated region
    $region6: #{tpu_custom_call.1} parent=1 // pred_check
      _
    $region7: #{tpu_custom_call.1} parent=1 // pred_check_branch
      %30 = sbr.rel (0) target = $region9
    $region8: #{tpu_custom_call.1} parent=1 // pred_region
      %s32 = ssub.s32 256, 256
      %33 = vsyncadd [#allocation7], %s32
      %s34 = sshll.u32 [#allocation6], 4
      %s35 = int_to_ptr.vmem [resolvable:$true] %s34
      %40 = dma.hbm_to_vmem [thread:$0]  %s1, 256, %s35, [#allocation7], 64, 64, 4
    $region9: #{tpu_custom_call.1} parent=1 // pred_fallthru
      _
    // Predicated region
    $region10: #{tpu_custom_call.1} parent=1 // pred_check
      _
    $region11: #{tpu_custom_call.1} parent=1 // pred_check_branch
      %42 = sbr.rel (0) target = $region13
    $region12: #{tpu_custom_call.1} parent=1 // pred_region
      %s44 = ssub.s32 256, 256
      %45 = vsyncadd [#allocation7], %s44
      %s46 = sshll.u32 [#allocation8], 4
      %s47 = int_to_ptr.vmem [resolvable:$true] %s46
      %52 = dma.hbm_to_vmem [thread:$0]  %s2, 256, %s47, [#allocation7], 64, 64, 4
    $region13: #{tpu_custom_call.1} parent=1 // pred_fallthru
      _
    // Predicated region
    $region14: #{tpu_custom_call.1} parent=1 // pred_check
      _
    $region15: #{tpu_custom_call.1} parent=1 // pred_check_branch
      %54 = sbr.rel (0) target = $region17
    $region16: #{tpu_custom_call.1} parent=1 // pred_region
      _
    $region17: #{tpu_custom_call.1} parent=1 // pred_fallthru
      _
    // Predicated region
    $region18: #{tpu_custom_call.1} parent=1 // pred_check
      _
    $region19: #{tpu_custom_call.1} parent=1 // pred_check_branch
      %56 = sbr.rel (0) target = $region21
    $region20: #{tpu_custom_call.1} parent=1 // pred_region
      %s58 = ssub.s32 512, 512
      %59 = vsyncadd [#allocation10], %s58
      %s60 = sshll.u32 [#allocation9], 4
      %s61 = int_to_ptr.vmem [resolvable:$true] %s60
      %66 = dma.hbm_to_vmem [thread:$0]  %s4, 512, %s61, [#allocation10], 128, 128, 8
    $region21: #{tpu_custom_call.1} parent=1 // pred_fallthru
      _
    // Predicated region
    $region22: #{tpu_custom_call.1} parent=1 // pred_check
      _
    $region23: #{tpu_custom_call.1} parent=1 // pred_check_branch
      %68 = sbr.rel (0) target = $region25
    $region24: #{tpu_custom_call.1} parent=1 // pred_region
      _
    $region25: #{tpu_custom_call.1} parent=1 // pred_fallthru
      _
    // Predicated region
    $region26: #{tpu_custom_call.1} parent=1 // pred_check
      _
    $region27: #{tpu_custom_call.1} parent=1 // pred_check_branch
      %70 = sbr.rel (0) target = $region29
    $region28: #{tpu_custom_call.1} parent=1 // pred_region
      %s72 = ssub.s32 2048, 2048
      %73 = vsyncadd [#allocation10], %s72
      %s74 = sshll.u32 [#allocation11], 4
      %s75 = int_to_ptr.vmem [resolvable:$true] %s74
      %80 = dma.hbm_to_vmem [thread:$0]  %s6, 2048, %s75, [#allocation10], 128, 128, 8
    $region29: #{tpu_custom_call.1} parent=1 // pred_fallthru
      _
    // Predicated region
    $region30: #{tpu_custom_call.1} parent=1 // pred_check
      _
    $region31: #{tpu_custom_call.1} parent=1 // pred_check_branch
      %82 = sbr.rel (0) target = $region33
    $region32: #{tpu_custom_call.1} parent=1 // pred_region
      _
    $region33: #{tpu_custom_call.1} parent=1 // pred_fallthru
      _
    // Predicated region
    $region34: #{tpu_custom_call.1} parent=1 // pred_check
      _
    $region35: #{tpu_custom_call.1} parent=1 // pred_check_branch
      %84 = sbr.rel (0) target = $region37
    $region36: #{tpu_custom_call.1} parent=1 // pred_region
      %85 = dma.done [#allocation4], 512
    $region37: #{tpu_custom_call.1} parent=1 // pred_fallthru
      _
    // Predicated region
    $region38: #{tpu_custom_call.1} parent=1 // pred_check
      _
    $region39: #{tpu_custom_call.1} parent=1 // pred_check_branch
      %87 = sbr.rel (0) target = $region41
    $region40: #{tpu_custom_call.1} parent=1 // pred_region
      %88 = dma.done [#allocation7], 256
    $region41: #{tpu_custom_call.1} parent=1 // pred_fallthru
      _
    // Predicated region
    $region42: #{tpu_custom_call.1} parent=1 // pred_check
      _
    $region43: #{tpu_custom_call.1} parent=1 // pred_check_branch
      %90 = sbr.rel (0) target = $region45
    $region44: #{tpu_custom_call.1} parent=1 // pred_region
      %91 = dma.done [#allocation7], 256
    $region45: #{tpu_custom_call.1} parent=1 // pred_fallthru
      _
    // Predicated region
    $region46: #{tpu_custom_call.1} parent=1 // pred_check
      _
    $region47: #{tpu_custom_call.1} parent=1 // pred_check_branch
      %93 = sbr.rel (0) target = $region49
    $region48: #{tpu_custom_call.1} parent=1 // pred_region
      %94 = dma.done [#allocation10], 512
    $region49: #{tpu_custom_call.1} parent=1 // pred_fallthru
      _
    // Predicated region
    $region50: #{tpu_custom_call.1} parent=1 // pred_check
      _
    $region51: #{tpu_custom_call.1} parent=1 // pred_check_branch
      %96 = sbr.rel (0) target = $region53
    $region52: #{tpu_custom_call.1} parent=1 // pred_region
      %97 = dma.done [#allocation10], 2048
    $region53: #{tpu_custom_call.1} parent=1 // pred_fallthru
      _
    %v99 = vld [vmem:[#allocation8] sm:$0xf]
    %v100 = vld [vmem:[#allocation8 + $0x4] sm:$0xf]
    %v101 = vld [vmem:[#allocation8 + $0x8] sm:$0xf]
    %v102 = vld [vmem:[#allocation8 + $0xc] sm:$0xf]
    %v103 = vld [vmem:[#allocation3] sm:$0xf]
    %v104 = vld [vmem:[#allocation3 + $0x4] sm:$0xf]
    %v105 = vld [vmem:[#allocation3 + $0x8] sm:$0xf]
    %v106 = vld [vmem:[#allocation3 + $0xc] sm:$0xf]
    %v107 = vld [vmem:[#allocation3 + $0x10] sm:$0xf]
    %v108 = vld [vmem:[#allocation3 + $0x14] sm:$0xf]
    %v109 = vld [vmem:[#allocation3 + $0x18] sm:$0xf]
    %v110 = vld [vmem:[#allocation3 + $0x1c] sm:$0xf]
    %v111 = vld [vmem:[#allocation6] sm:$0xf]
    %v112 = vld [vmem:[#allocation6 + $0x4] sm:$0xf]
    %v113 = vld [vmem:[#allocation6 + $0x8] sm:$0xf]
    %v114 = vld [vmem:[#allocation6 + $0xc] sm:$0xf]
    %v115 = vld [vmem:[%s3] sm:$0x1]
    %v117 = vlaneseq
    %v118 = vshrl.u32 %v117, 7
    %v119 = vsub.s32 0, %v118
    %v120 = vrot.slane %v115, %v119
    %v130 = vunpack.c.l.b16 %v103
    %v131 = vunpack.c.l.b16 %v104
    %v132 = vunpack.c.l.b16 %v105
    %v133 = vunpack.c.l.b16 %v106
    %v134 = vunpack.c.l.b16 %v107
    %v135 = vunpack.c.l.b16 %v108
    %v136 = vunpack.c.l.b16 %v109
    %v137 = vunpack.c.l.b16 %v110
    %v138 = vpack.c.b16 %v131, %v130
    %v139 = vpack.c.b16 %v133, %v132
    %v140 = vpack.c.b16 %v135, %v134
    %v141 = vpack.c.b16 %v137, %v136
    %v146 = vunpack.c.l.b16 %v111
    %v147 = vunpack.c.l.b16 %v112
    %v148 = vunpack.c.l.b16 %v113
    %v149 = vunpack.c.l.b16 %v114
    %v150 = vpack.c.b16 %v147, %v146
    %v151 = vpack.c.b16 %v149, %v148
    %vm154 = vcmask 261120
    %v156 = vsel %vm154, %v138, 0
    %v159 = vsel %vm154, %v139, 0
    %v162 = vsel %vm154, %v140, 0
    %v165 = vsel %vm154, %v141, 0
    %167 = vmatprep.subr.bf16.mxu0 0
    %168 = vmatpush1.bf16.msra.mxu0 0
    %169 = vmatprep.subr.bf16.mxu0 0
    %170 = vmatpush1.bf16.msra.mxu0 0
    %171 = vmatprep.subr.bf16.mxu0 0
    %172 = vmatpush1.bf16.msra.mxu0 0
    %173 = vmatprep.subr.bf16.mxu0 0
    %174 = vmatpush1.bf16.msra.mxu0 0
    %175 = vmatprep.subr.bf16.mxu0 0
    %176 = vmatpush1.bf16.msra.mxu0 0
    %177 = vmatprep.subr.bf16.mxu0 0
    %178 = vmatpush1.bf16.msra.mxu0 0
    %179 = vmatprep.subr.bf16.mxu0 0
    %180 = vmatpush1.bf16.msra.mxu0 %v151
    %181 = vmatprep.subr.bf16.mxu0 0
    %182 = vmatpush1.bf16.msra.mxu0 %v150
    %183 = vmatprep.subr.bf16.mxu0 0
    %184 = vmatpush2.bf16.msra.mxu0 0
    %185 = vmatprep.subr.bf16.mxu0 0
    %186 = vmatpush2.bf16.msra.mxu0 0
    %187 = vmatprep.subr.bf16.mxu0 0
    %188 = vmatpush2.bf16.msra.mxu0 0
    %189 = vmatprep.subr.bf16.mxu0 0
    %190 = vmatpush2.bf16.msra.mxu0 0
    %191 = vmatprep.subr.bf16.mxu0 0
    %192 = vmatpush2.bf16.msra.mxu0 0
    %193 = vmatprep.subr.bf16.mxu0 0
    %194 = vmatpush2.bf16.msra.mxu0 0
    %195 = vmatprep.subr.bf16.mxu0 0
    %196 = vmatpush2.bf16.msra.mxu0 0
    %197 = vmatprep.subr.bf16.mxu0 0
    %198 = vmatpush2.bf16.msra.mxu0 0
    %199 = vmatprep.mubr.bf16.mxu0 0
    %200 = vmatmul.mubr.bf16.gmra.mxu0 %v156
    %v201 = vpop.f32.mrf.mxu0
    %v202 = vadd.f32 %v120, %v201
    %v203 = vpop.f32.mrf.mxu0
    %v204 = vpop.f32.mrf.mxu0
    %v205 = vadd.f32 %v120, %v204
    %v206 = vpop.f32.mrf.mxu0
    %207 = vmatprep.mubr.bf16.mxu0 0
    %208 = vmatmul.mubr.bf16.gmra.mxu0 %v159
    %v209 = vpop.f32.mrf.mxu0
    %v210 = vadd.f32 %v120, %v209
    %v211 = vpop.f32.mrf.mxu0
    %v212 = vpop.f32.mrf.mxu0
    %v213 = vadd.f32 %v120, %v212
    %v214 = vpop.f32.mrf.mxu0
    %215 = vmatprep.mubr.bf16.mxu0 0
    %216 = vmatmul.mubr.bf16.gmra.mxu0 %v162
    %v217 = vpop.f32.mrf.mxu0
    %v218 = vadd.f32 %v120, %v217
    %v219 = vpop.f32.mrf.mxu0
    %v220 = vpop.f32.mrf.mxu0
    %v221 = vadd.f32 %v120, %v220
    %v222 = vpop.f32.mrf.mxu0
    %223 = vmatprep.mubr.bf16.mxu0 0
    %224 = vmatmul.mubr.bf16.gmra.mxu0 %v165
    %v225 = vpop.f32.mrf.mxu0
    %v226 = vadd.f32 %v120, %v225
    %v227 = vpop.f32.mrf.mxu0
    %v228 = vpop.f32.mrf.mxu0
    %v229 = vadd.f32 %v120, %v228
    %v230 = vpop.f32.mrf.mxu0
    %231 = vdwg.mxu0
    %232 = vst [vmem:[#allocation2] sm:$0xff] %v202
    %233 = vst [vmem:[#allocation2 + $0x8] sm:$0xff] %v205
    %234 = vst [vmem:[#allocation2 + $0x10] sm:$0xff] %v210
    %235 = vst [vmem:[#allocation2 + $0x18] sm:$0xff] %v213
    %236 = vst [vmem:[#allocation2 + $0x20] sm:$0xff] %v218
    %237 = vst [vmem:[#allocation2 + $0x28] sm:$0xff] %v221
    %238 = vst [vmem:[#allocation2 + $0x30] sm:$0xff] %v226
    %239 = vst [vmem:[#allocation2 + $0x38] sm:$0xff] %v229
    %v240 = vld [vmem:[#allocation2] sm:$0xff]
    %v245 = vunpack.c.l.b16 %v99
    %v246 = vunpack.c.l.b16 %v100
    %v247 = vunpack.c.l.b16 %v101
    %v248 = vunpack.c.l.b16 %v102
    %v249 = vpack.c.b16 %v246, %v245
    %v250 = vpack.c.b16 %v248, %v247
    %v254 = vsel %vm154, 0, 0
    %256 = vmatprep.subr.bf16.mxu0 0
    %257 = vmatpush1.bf16.msra.mxu0 0
    %258 = vmatprep.subr.bf16.mxu0 0
    %259 = vmatpush1.bf16.msra.mxu0 0
    %260 = vmatprep.subr.bf16.mxu0 0
    %261 = vmatpush1.bf16.msra.mxu0 0
    %262 = vmatprep.subr.bf16.mxu0 0
    %263 = vmatpush1.bf16.msra.mxu0 0
    %264 = vmatprep.subr.bf16.mxu0 0
    %265 = vmatpush1.bf16.msra.mxu0 0
    %266 = vmatprep.subr.bf16.mxu0 0
    %267 = vmatpush1.bf16.msra.mxu0 0
    %268 = vmatprep.subr.bf16.mxu0 0
    %269 = vmatpush1.bf16.msra.mxu0 %v250
    %270 = vmatprep.subr.bf16.mxu0 0
    %271 = vmatpush1.bf16.msra.mxu0 %v249
    %272 = vmatprep.subr.bf16.mxu0 0
    %273 = vmatpush2.bf16.msra.mxu0 0
    %274 = vmatprep.subr.bf16.mxu0 0
    %275 = vmatpush2.bf16.msra.mxu0 0
    %276 = vmatprep.subr.bf16.mxu0 0
    %277 = vmatpush2.bf16.msra.mxu0 0
    %278 = vmatprep.subr.bf16.mxu0 0
    %279 = vmatpush2.bf16.msra.mxu0 0
    %280 = vmatprep.subr.bf16.mxu0 0
    %281 = vmatpush2.bf16.msra.mxu0 0
    %282 = vmatprep.subr.bf16.mxu0 0
    %283 = vmatpush2.bf16.msra.mxu0 0
    %284 = vmatprep.subr.bf16.mxu0 0
    %285 = vmatpush2.bf16.msra.mxu0 0
    %286 = vmatprep.subr.bf16.mxu0 0
    %287 = vmatpush2.bf16.msra.mxu0 0
    %288 = vmatprep.mubr.bf16.mxu0 0
    %289 = vmatmul.mubr.bf16.gmra.mxu0 %v254
    %v290 = vpop.f32.mrf.mxu0
    %v291 = vadd.f32 0.0, %v290
    %v292 = vpop.f32.mrf.mxu0
    %v293 = vpop.f32.mrf.mxu0
    %v294 = vpop.f32.mrf.mxu0
    %295 = vdwg.mxu0
    %v296 = vadd.f32 %v240, %v291
    %v297 = vtanh.pop %v296
    %v298 = vmul.f32 %v297, 0.5
    %v299 = vadd.f32 %v298, 0.5
    %v300 = vmul.f32 %v299, 0.0
    %302 = vrot.lane.b32.xlu0 %v297, 64
    %v303 = vpop.permute.xlu0 %302
    %v305 = vmul.f32 %v299, %v303
    %307 = vrot.lane.b32.xlu0 %v305, 32
    %v308 = vpop.permute.xlu0 %307
    %v310 = vadd.f32 %v300, %v308
    %v311 = vtanh.pop %v310
    %313 = vrot.lane.b32.xlu0 %v311, 64
    %v314 = vpop.permute.xlu0 %313
    %v316 = vmul.f32 %v299, %v314
    %v317 = vld [vmem:[#allocation2 + $0x8] sm:$0xff]
    %v318 = vpack.c.bf16 %v316, %v316
    %320 = vrot.lane.b32.xlu0 %v318, 32
    %v321 = vpop.permute.xlu0 %320
    %v323 = vsel %vm154, %v321, 0
    %325 = vmatprep.subr.bf16.mxu0 0
    %326 = vmatpush1.bf16.msra.mxu0 0
    %327 = vmatprep.subr.bf16.mxu0 0
    %328 = vmatpush1.bf16.msra.mxu0 0
    %329 = vmatprep.subr.bf16.mxu0 0
    %330 = vmatpush1.bf16.msra.mxu0 0
    %331 = vmatprep.subr.bf16.mxu0 0
    %332 = vmatpush1.bf16.msra.mxu0 0
    %333 = vmatprep.subr.bf16.mxu0 0
    %334 = vmatpush1.bf16.msra.mxu0 0
    %335 = vmatprep.subr.bf16.mxu0 0
    %336 = vmatpush1.bf16.msra.mxu0 0
    %337 = vmatprep.subr.bf16.mxu0 0
    %338 = vmatpush1.bf16.msra.mxu0 %v250
    %339 = vmatprep.subr.bf16.mxu0 0
    %340 = vmatpush1.bf16.msra.mxu0 %v249
    %341 = vmatprep.subr.bf16.mxu0 0
    %342 = vmatpush2.bf16.msra.mxu0 0
    %343 = vmatprep.subr.bf16.mxu0 0
    %344 = vmatpush2.bf16.msra.mxu0 0
    %345 = vmatprep.subr.bf16.mxu0 0
    %346 = vmatpush2.bf16.msra.mxu0 0
    %347 = vmatprep.subr.bf16.mxu0 0
    %348 = vmatpush2.bf16.msra.mxu0 0
    %349 = vmatprep.subr.bf16.mxu0 0
    %350 = vmatpush2.bf16.msra.mxu0 0
    %351 = vmatprep.subr.bf16.mxu0 0
    %352 = vmatpush2.bf16.msra.mxu0 0
    %353 = vmatprep.subr.bf16.mxu0 0
    %354 = vmatpush2.bf16.msra.mxu0 0
    %355 = vmatprep.subr.bf16.mxu0 0
    %356 = vmatpush2.bf16.msra.mxu0 0
    %357 = vmatprep.mubr.bf16.mxu0 0
    %358 = vmatmul.mubr.bf16.gmra.mxu0 %v323
    %v359 = vpop.f32.mrf.mxu0
    %v360 = vadd.f32 0.0, %v359
    %v361 = vpop.f32.mrf.mxu0
    %v362 = vpop.f32.mrf.mxu0
    %v363 = vpop.f32.mrf.mxu0
    %364 = vdwg.mxu0
    %v365 = vadd.f32 %v317, %v360
    %v366 = vtanh.pop %v365
    %v367 = vmul.f32 %v366, 0.5
    %v368 = vadd.f32 %v367, 0.5
    %v369 = vmul.f32 %v368, %v310
    %371 = vrot.lane.b32.xlu0 %v366, 64
    %v372 = vpop.permute.xlu0 %371
    %v374 = vmul.f32 %v368, %v372
    %376 = vrot.lane.b32.xlu0 %v374, 32
    %v377 = vpop.permute.xlu0 %376
    %v379 = vadd.f32 %v369, %v377
    %v380 = vtanh.pop %v379
    %382 = vrot.lane.b32.xlu0 %v380, 64
    %v383 = vpop.permute.xlu0 %382
    %v385 = vmul.f32 %v368, %v383
    %v386 = vld [vmem:[#allocation2 + $0x10] sm:$0xff]
    %v387 = vpack.c.bf16 %v385, %v385
    %389 = vrot.lane.b32.xlu0 %v387, 32
    %v390 = vpop.permute.xlu0 %389
    %v392 = vsel %vm154, %v390, 0
    %394 = vmatprep.subr.bf16.mxu0 0
    %395 = vmatpush1.bf16.msra.mxu0 0
    %396 = vmatprep.subr.bf16.mxu0 0
    %397 = vmatpush1.bf16.msra.mxu0 0
    %398 = vmatprep.subr.bf16.mxu0 0
    %399 = vmatpush1.bf16.msra.mxu0 0
    %400 = vmatprep.subr.bf16.mxu0 0
    %401 = vmatpush1.bf16.msra.mxu0 0
    %402 = vmatprep.subr.bf16.mxu0 0
    %403 = vmatpush1.bf16.msra.mxu0 0
    %404 = vmatprep.subr.bf16.mxu0 0
    %405 = vmatpush1.bf16.msra.mxu0 0
    %406 = vmatprep.subr.bf16.mxu0 0
    %407 = vmatpush1.bf16.msra.mxu0 %v250
    %408 = vmatprep.subr.bf16.mxu0 0
    %409 = vmatpush1.bf16.msra.mxu0 %v249
    %410 = vmatprep.subr.bf16.mxu0 0
    %411 = vmatpush2.bf16.msra.mxu0 0
    %412 = vmatprep.subr.bf16.mxu0 0
    %413 = vmatpush2.bf16.msra.mxu0 0
    %414 = vmatprep.subr.bf16.mxu0 0
    %415 = vmatpush2.bf16.msra.mxu0 0
    %416 = vmatprep.subr.bf16.mxu0 0
    %417 = vmatpush2.bf16.msra.mxu0 0
    %418 = vmatprep.subr.bf16.mxu0 0
    %419 = vmatpush2.bf16.msra.mxu0 0
    %420 = vmatprep.subr.bf16.mxu0 0
    %421 = vmatpush2.bf16.msra.mxu0 0
    %422 = vmatprep.subr.bf16.mxu0 0
    %423 = vmatpush2.bf16.msra.mxu0 0
    %424 = vmatprep.subr.bf16.mxu0 0
    %425 = vmatpush2.bf16.msra.mxu0 0
    %426 = vmatprep.mubr.bf16.mxu0 0
    %427 = vmatmul.mubr.bf16.gmra.mxu0 %v392
    %v428 = vpop.f32.mrf.mxu0
    %v429 = vadd.f32 0.0, %v428
    %v430 = vpop.f32.mrf.mxu0
    %v431 = vpop.f32.mrf.mxu0
    %v432 = vpop.f32.mrf.mxu0
    %433 = vdwg.mxu0
    %v434 = vadd.f32 %v386, %v429
    %v435 = vtanh.pop %v434
    %v436 = vmul.f32 %v435, 0.5
    %v437 = vadd.f32 %v436, 0.5
    %v438 = vmul.f32 %v437, %v379
    %440 = vrot.lane.b32.xlu0 %v435, 64
    %v441 = vpop.permute.xlu0 %440
    %v443 = vmul.f32 %v437, %v441
    %445 = vrot.lane.b32.xlu0 %v443, 32
    %v446 = vpop.permute.xlu0 %445
    %v448 = vadd.f32 %v438, %v446
    %v449 = vtanh.pop %v448
    %451 = vrot.lane.b32.xlu0 %v449, 64
    %v452 = vpop.permute.xlu0 %451
    %v454 = vmul.f32 %v437, %v452
    %v455 = vld [vmem:[#allocation2 + $0x18] sm:$0xff]
    %v456 = vpack.c.bf16 %v454, %v454
    %458 = vrot.lane.b32.xlu0 %v456, 32
    %v459 = vpop.permute.xlu0 %458
    %v461 = vsel %vm154, %v459, 0
    %463 = vmatprep.subr.bf16.mxu0 0
    %464 = vmatpush1.bf16.msra.mxu0 0
    %465 = vmatprep.subr.bf16.mxu0 0
    %466 = vmatpush1.bf16.msra.mxu0 0
    %467 = vmatprep.subr.bf16.mxu0 0
    %468 = vmatpush1.bf16.msra.mxu0 0
    %469 = vmatprep.subr.bf16.mxu0 0
    %470 = vmatpush1.bf16.msra.mxu0 0
    %471 = vmatprep.subr.bf16.mxu0 0
    %472 = vmatpush1.bf16.msra.mxu0 0
    %473 = vmatprep.subr.bf16.mxu0 0
    %474 = vmatpush1.bf16.msra.mxu0 0
    %475 = vmatprep.subr.bf16.mxu0 0
    %476 = vmatpush1.bf16.msra.mxu0 %v250
    %477 = vmatprep.subr.bf16.mxu0 0
    %478 = vmatpush1.bf16.msra.mxu0 %v249
    %479 = vmatprep.subr.bf16.mxu0 0
    %480 = vmatpush2.bf16.msra.mxu0 0
    %481 = vmatprep.subr.bf16.mxu0 0
    %482 = vmatpush2.bf16.msra.mxu0 0
    %483 = vmatprep.subr.bf16.mxu0 0
    %484 = vmatpush2.bf16.msra.mxu0 0
    %485 = vmatprep.subr.bf16.mxu0 0
    %486 = vmatpush2.bf16.msra.mxu0 0
    %487 = vmatprep.subr.bf16.mxu0 0
    %488 = vmatpush2.bf16.msra.mxu0 0
    %489 = vmatprep.subr.bf16.mxu0 0
    %490 = vmatpush2.bf16.msra.mxu0 0
    %491 = vmatprep.subr.bf16.mxu0 0
    %492 = vmatpush2.bf16.msra.mxu0 0
    %493 = vmatprep.subr.bf16.mxu0 0
    %494 = vmatpush2.bf16.msra.mxu0 0
    %495 = vmatprep.mubr.bf16.mxu0 0
    %496 = vmatmul.mubr.bf16.gmra.mxu0 %v461
    %v497 = vpop.f32.mrf.mxu0
    %v498 = vadd.f32 0.0, %v497
    %v499 = vpop.f32.mrf.mxu0
    %v500 = vpop.f32.mrf.mxu0
    %v501 = vpop.f32.mrf.mxu0
    %502 = vdwg.mxu0
    %v503 = vadd.f32 %v455, %v498
    %v504 = vtanh.pop %v503
    %v505 = vmul.f32 %v504, 0.5
    %v506 = vadd.f32 %v505, 0.5
    %v507 = vmul.f32 %v506, %v448
    %509 = vrot.lane.b32.xlu0 %v504, 64
    %v510 = vpop.permute.xlu0 %509
    %v512 = vmul.f32 %v506, %v510
    %514 = vrot.lane.b32.xlu0 %v512, 32
    %v515 = vpop.permute.xlu0 %514
    %v517 = vadd.f32 %v507, %v515
    %v518 = vtanh.pop %v517
    %520 = vrot.lane.b32.xlu0 %v518, 64
    %v521 = vpop.permute.xlu0 %520
    %v523 = vmul.f32 %v506, %v521
    %v524 = vld [vmem:[#allocation2 + $0x20] sm:$0xff]
    %v525 = vpack.c.bf16 %v523, %v523
    %527 = vrot.lane.b32.xlu0 %v525, 32
    %v528 = vpop.permute.xlu0 %527
    %v530 = vsel %vm154, %v528, 0
    %532 = vmatprep.subr.bf16.mxu0 0
    %533 = vmatpush1.bf16.msra.mxu0 0
    %534 = vmatprep.subr.bf16.mxu0 0
    %535 = vmatpush1.bf16.msra.mxu0 0
    %536 = vmatprep.subr.bf16.mxu0 0
    %537 = vmatpush1.bf16.msra.mxu0 0
    %538 = vmatprep.subr.bf16.mxu0 0
    %539 = vmatpush1.bf16.msra.mxu0 0
    %540 = vmatprep.subr.bf16.mxu0 0
    %541 = vmatpush1.bf16.msra.mxu0 0
    %542 = vmatprep.subr.bf16.mxu0 0
    %543 = vmatpush1.bf16.msra.mxu0 0
    %544 = vmatprep.subr.bf16.mxu0 0
    %545 = vmatpush1.bf16.msra.mxu0 %v250
    %546 = vmatprep.subr.bf16.mxu0 0
    %547 = vmatpush1.bf16.msra.mxu0 %v249
    %548 = vmatprep.subr.bf16.mxu0 0
    %549 = vmatpush2.bf16.msra.mxu0 0
    %550 = vmatprep.subr.bf16.mxu0 0
    %551 = vmatpush2.bf16.msra.mxu0 0
    %552 = vmatprep.subr.bf16.mxu0 0
    %553 = vmatpush2.bf16.msra.mxu0 0
    %554 = vmatprep.subr.bf16.mxu0 0
    %555 = vmatpush2.bf16.msra.mxu0 0
    %556 = vmatprep.subr.bf16.mxu0 0
    %557 = vmatpush2.bf16.msra.mxu0 0
    %558 = vmatprep.subr.bf16.mxu0 0
    %559 = vmatpush2.bf16.msra.mxu0 0
    %560 = vmatprep.subr.bf16.mxu0 0
    %561 = vmatpush2.bf16.msra.mxu0 0
    %562 = vmatprep.subr.bf16.mxu0 0
    %563 = vmatpush2.bf16.msra.mxu0 0
    %564 = vmatprep.mubr.bf16.mxu0 0
    %565 = vmatmul.mubr.bf16.gmra.mxu0 %v530
    %v566 = vpop.f32.mrf.mxu0
    %v567 = vadd.f32 0.0, %v566
    %v568 = vpop.f32.mrf.mxu0
    %v569 = vpop.f32.mrf.mxu0
    %v570 = vpop.f32.mrf.mxu0
    %571 = vdwg.mxu0
    %v572 = vadd.f32 %v524, %v567
    %v573 = vtanh.pop %v572
    %v574 = vmul.f32 %v573, 0.5
    %v575 = vadd.f32 %v574, 0.5
    %v576 = vmul.f32 %v575, %v517
    %578 = vrot.lane.b32.xlu0 %v573, 64
    %v579 = vpop.permute.xlu0 %578
    %v581 = vmul.f32 %v575, %v579
    %583 = vrot.lane.b32.xlu0 %v581, 32
    %v584 = vpop.permute.xlu0 %583
    %v586 = vadd.f32 %v576, %v584
    %v587 = vtanh.pop %v586
    %589 = vrot.lane.b32.xlu0 %v587, 64
    %v590 = vpop.permute.xlu0 %589
    %v592 = vmul.f32 %v575, %v590
    %v593 = vld [vmem:[#allocation2 + $0x28] sm:$0xff]
    %v594 = vpack.c.bf16 %v592, %v592
    %596 = vrot.lane.b32.xlu0 %v594, 32
    %v597 = vpop.permute.xlu0 %596
    %v599 = vsel %vm154, %v597, 0
    %601 = vmatprep.subr.bf16.mxu0 0
    %602 = vmatpush1.bf16.msra.mxu0 0
    %603 = vmatprep.subr.bf16.mxu0 0
    %604 = vmatpush1.bf16.msra.mxu0 0
    %605 = vmatprep.subr.bf16.mxu0 0
    %606 = vmatpush1.bf16.msra.mxu0 0
    %607 = vmatprep.subr.bf16.mxu0 0
    %608 = vmatpush1.bf16.msra.mxu0 0
    %609 = vmatprep.subr.bf16.mxu0 0
    %610 = vmatpush1.bf16.msra.mxu0 0
    %611 = vmatprep.subr.bf16.mxu0 0
    %612 = vmatpush1.bf16.msra.mxu0 0
    %613 = vmatprep.subr.bf16.mxu0 0
    %614 = vmatpush1.bf16.msra.mxu0 %v250
    %615 = vmatprep.subr.bf16.mxu0 0
    %616 = vmatpush1.bf16.msra.mxu0 %v249
    %617 = vmatprep.subr.bf16.mxu0 0
    %618 = vmatpush2.bf16.msra.mxu0 0
    %619 = vmatprep.subr.bf16.mxu0 0
    %620 = vmatpush2.bf16.msra.mxu0 0
    %621 = vmatprep.subr.bf16.mxu0 0
    %622 = vmatpush2.bf16.msra.mxu0 0
    %623 = vmatprep.subr.bf16.mxu0 0
    %624 = vmatpush2.bf16.msra.mxu0 0
    %625 = vmatprep.subr.bf16.mxu0 0
    %626 = vmatpush2.bf16.msra.mxu0 0
    %627 = vmatprep.subr.bf16.mxu0 0
    %628 = vmatpush2.bf16.msra.mxu0 0
    %629 = vmatprep.subr.bf16.mxu0 0
    %630 = vmatpush2.bf16.msra.mxu0 0
    %631 = vmatprep.subr.bf16.mxu0 0
    %632 = vmatpush2.bf16.msra.mxu0 0
    %633 = vmatprep.mubr.bf16.mxu0 0
    %634 = vmatmul.mubr.bf16.gmra.mxu0 %v599
    %v635 = vpop.f32.mrf.mxu0
    %v636 = vadd.f32 0.0, %v635
    %v637 = vpop.f32.mrf.mxu0
    %v638 = vpop.f32.mrf.mxu0
    %v639 = vpop.f32.mrf.mxu0
    %640 = vdwg.mxu0
    %v641 = vadd.f32 %v593, %v636
    %v642 = vtanh.pop %v641
    %v643 = vmul.f32 %v642, 0.5
    %v644 = vadd.f32 %v643, 0.5
    %v645 = vmul.f32 %v644, %v586
    %647 = vrot.lane.b32.xlu0 %v642, 64
    %v648 = vpop.permute.xlu0 %647
    %v650 = vmul.f32 %v644, %v648
    %652 = vrot.lane.b32.xlu0 %v650, 32
    %v653 = vpop.permute.xlu0 %652
    %v655 = vadd.f32 %v645, %v653
    %v656 = vtanh.pop %v655
    %658 = vrot.lane.b32.xlu0 %v656, 64
    %v659 = vpop.permute.xlu0 %658
    %v661 = vmul.f32 %v644, %v659
    %v662 = vld [vmem:[#allocation2 + $0x30] sm:$0xff]
    %v663 = vpack.c.bf16 %v661, %v661
    %665 = vrot.lane.b32.xlu0 %v663, 32
    %v666 = vpop.permute.xlu0 %665
    %v668 = vsel %vm154, %v666, 0
    %670 = vmatprep.subr.bf16.mxu0 0
    %671 = vmatpush1.bf16.msra.mxu0 0
    %672 = vmatprep.subr.bf16.mxu0 0
    %673 = vmatpush1.bf16.msra.mxu0 0
    %674 = vmatprep.subr.bf16.mxu0 0
    %675 = vmatpush1.bf16.msra.mxu0 0
    %676 = vmatprep.subr.bf16.mxu0 0
    %677 = vmatpush1.bf16.msra.mxu0 0
    %678 = vmatprep.subr.bf16.mxu0 0
    %679 = vmatpush1.bf16.msra.mxu0 0
    %680 = vmatprep.subr.bf16.mxu0 0
    %681 = vmatpush1.bf16.msra.mxu0 0
    %682 = vmatprep.subr.bf16.mxu0 0
    %683 = vmatpush1.bf16.msra.mxu0 %v250
    %684 = vmatprep.subr.bf16.mxu0 0
    %685 = vmatpush1.bf16.msra.mxu0 %v249
    %686 = vmatprep.subr.bf16.mxu0 0
    %687 = vmatpush2.bf16.msra.mxu0 0
    %688 = vmatprep.subr.bf16.mxu0 0
    %689 = vmatpush2.bf16.msra.mxu0 0
    %690 = vmatprep.subr.bf16.mxu0 0
    %691 = vmatpush2.bf16.msra.mxu0 0
    %692 = vmatprep.subr.bf16.mxu0 0
    %693 = vmatpush2.bf16.msra.mxu0 0
    %694 = vmatprep.subr.bf16.mxu0 0
    %695 = vmatpush2.bf16.msra.mxu0 0
    %696 = vmatprep.subr.bf16.mxu0 0
    %697 = vmatpush2.bf16.msra.mxu0 0
    %698 = vmatprep.subr.bf16.mxu0 0
    %699 = vmatpush2.bf16.msra.mxu0 0
    %700 = vmatprep.subr.bf16.mxu0 0
    %701 = vmatpush2.bf16.msra.mxu0 0
    %702 = vmatprep.mubr.bf16.mxu0 0
    %703 = vmatmul.mubr.bf16.gmra.mxu0 %v668
    %v704 = vpop.f32.mrf.mxu0
    %v705 = vadd.f32 0.0, %v704
    %v706 = vpop.f32.mrf.mxu0
    %v707 = vpop.f32.mrf.mxu0
    %v708 = vpop.f32.mrf.mxu0
    %709 = vdwg.mxu0
    %v710 = vadd.f32 %v662, %v705
    %v711 = vtanh.pop %v710
    %v712 = vmul.f32 %v711, 0.5
    %v713 = vadd.f32 %v712, 0.5
    %v714 = vmul.f32 %v713, %v655
    %716 = vrot.lane.b32.xlu0 %v711, 64
    %v717 = vpop.permute.xlu0 %716
    %v719 = vmul.f32 %v713, %v717
    %721 = vrot.lane.b32.xlu0 %v719, 32
    %v722 = vpop.permute.xlu0 %721
    %v724 = vadd.f32 %v714, %v722
    %v725 = vtanh.pop %v724
    %727 = vrot.lane.b32.xlu0 %v725, 64
    %v728 = vpop.permute.xlu0 %727
    %v730 = vmul.f32 %v713, %v728
    %v731 = vld [vmem:[#allocation2 + $0x38] sm:$0xff]
    %v732 = vpack.c.bf16 %v730, %v730
    %734 = vrot.lane.b32.xlu0 %v732, 32
    %v735 = vpop.permute.xlu0 %734
    %v737 = vsel %vm154, %v735, 0
    %739 = vmatprep.subr.bf16.mxu0 0
    %740 = vmatpush1.bf16.msra.mxu0 0
    %741 = vmatprep.subr.bf16.mxu0 0
    %742 = vmatpush1.bf16.msra.mxu0 0
    %743 = vmatprep.subr.bf16.mxu0 0
    %744 = vmatpush1.bf16.msra.mxu0 0
    %745 = vmatprep.subr.bf16.mxu0 0
    %746 = vmatpush1.bf16.msra.mxu0 0
    %747 = vmatprep.subr.bf16.mxu0 0
    %748 = vmatpush1.bf16.msra.mxu0 0
    %749 = vmatprep.subr.bf16.mxu0 0
    %750 = vmatpush1.bf16.msra.mxu0 0
    %751 = vmatprep.subr.bf16.mxu0 0
    %752 = vmatpush1.bf16.msra.mxu0 %v250
    %753 = vmatprep.subr.bf16.mxu0 0
    %754 = vmatpush1.bf16.msra.mxu0 %v249
    %755 = vmatprep.subr.bf16.mxu0 0
    %756 = vmatpush2.bf16.msra.mxu0 0
    %757 = vmatprep.subr.bf16.mxu0 0
    %758 = vmatpush2.bf16.msra.mxu0 0
    %759 = vmatprep.subr.bf16.mxu0 0
    %760 = vmatpush2.bf16.msra.mxu0 0
    %761 = vmatprep.subr.bf16.mxu0 0
    %762 = vmatpush2.bf16.msra.mxu0 0
    %763 = vmatprep.subr.bf16.mxu0 0
    %764 = vmatpush2.bf16.msra.mxu0 0
    %765 = vmatprep.subr.bf16.mxu0 0
    %766 = vmatpush2.bf16.msra.mxu0 0
    %767 = vmatprep.subr.bf16.mxu0 0
    %768 = vmatpush2.bf16.msra.mxu0 0
    %769 = vmatprep.subr.bf16.mxu0 0
    %770 = vmatpush2.bf16.msra.mxu0 0
    %771 = vmatprep.mubr.bf16.mxu0 0
    %772 = vmatmul.mubr.bf16.gmra.mxu0 %v737
    %v773 = vpop.f32.mrf.mxu0
    %v774 = vadd.f32 0.0, %v773
    %v775 = vpop.f32.mrf.mxu0
    %v776 = vpop.f32.mrf.mxu0
    %v777 = vpop.f32.mrf.mxu0
    %778 = vdwg.mxu0
    %v779 = vadd.f32 %v731, %v774
    %v780 = vtanh.pop %v779
    %v781 = vmul.f32 %v780, 0.5
    %v782 = vadd.f32 %v781, 0.5
    %v783 = vmul.f32 %v782, %v724
    %785 = vrot.lane.b32.xlu0 %v780, 64
    %v786 = vpop.permute.xlu0 %785
    %v788 = vmul.f32 %v782, %v786
    %790 = vrot.lane.b32.xlu0 %v788, 32
    %v791 = vpop.permute.xlu0 %790
    %v793 = vadd.f32 %v783, %v791
    %v794 = vld [vmem:[#allocation9] sm:$0xff]
    %v795 = vld [vmem:[#allocation9 + $0x8] sm:$0xff]
    %v796 = vld [vmem:[#allocation9 + $0x10] sm:$0xff]
    %v797 = vld [vmem:[#allocation9 + $0x18] sm:$0xff]
    %v798 = vld [vmem:[%s5] sm:$0x1]
    %v800 = vlaneseq
    %v801 = vshrl.u32 %v800, 7
    %v802 = vsub.s32 0, %v801
    %v803 = vrot.slane %v798, %v802
    %806 = vrot.lane.b32.xlu0 %v793, 96
    %v807 = vpop.permute.xlu0 %806
    %v808 = vsel %vm154, %v807, 0
    %810 = vmatprep.subr.mxu0 0.0
    %811 = vmatpush1.msra.mxu0 0.0
    %812 = vmatprep.subr.mxu0 0.0
    %813 = vmatpush1.msra.mxu0 0.0
    %814 = vmatprep.subr.mxu0 0.0
    %815 = vmatpush1.msra.mxu0 0.0
    %816 = vmatprep.subr.mxu0 0.0
    %817 = vmatpush1.msra.mxu0 0.0
    %818 = vmatprep.subr.mxu0 0.0
    %819 = vmatpush1.msra.mxu0 0.0
    %820 = vmatprep.subr.mxu0 0.0
    %821 = vmatpush1.msra.mxu0 0.0
    %822 = vmatprep.subr.mxu0 0.0
    %823 = vmatpush1.msra.mxu0 0.0
    %824 = vmatprep.subr.mxu0 0.0
    %825 = vmatpush1.msra.mxu0 0.0
    %826 = vmatprep.subr.mxu0 0.0
    %827 = vmatpush1.msra.mxu0 0.0
    %828 = vmatprep.subr.mxu0 0.0
    %829 = vmatpush1.msra.mxu0 0.0
    %830 = vmatprep.subr.mxu0 0.0
    %831 = vmatpush1.msra.mxu0 0.0
    %832 = vmatprep.subr.mxu0 0.0
    %833 = vmatpush1.msra.mxu0 0.0
    %834 = vmatprep.subr.mxu0 0.0
    %835 = vmatpush1.msra.mxu0 %v797
    %836 = vmatprep.subr.mxu0 0.0
    %837 = vmatpush1.msra.mxu0 %v796
    %838 = vmatprep.subr.mxu0 0.0
    %839 = vmatpush1.msra.mxu0 %v795
    %840 = vmatprep.subr.mxu0 0.0
    %841 = vmatpush1.msra.mxu0 %v794
    %842 = vmatprep.subr.mxu0 0.0
    %843 = vmatpush2.msra.mxu0 0.0
    %844 = vmatprep.subr.mxu0 0.0
    %845 = vmatpush2.msra.mxu0 0.0
    %846 = vmatprep.subr.mxu0 0.0
    %847 = vmatpush2.msra.mxu0 0.0
    %848 = vmatprep.subr.mxu0 0.0
    %849 = vmatpush2.msra.mxu0 0.0
    %850 = vmatprep.subr.mxu0 0.0
    %851 = vmatpush2.msra.mxu0 0.0
    %852 = vmatprep.subr.mxu0 0.0
    %853 = vmatpush2.msra.mxu0 0.0
    %854 = vmatprep.subr.mxu0 0.0
    %855 = vmatpush2.msra.mxu0 0.0
    %856 = vmatprep.subr.mxu0 0.0
    %857 = vmatpush2.msra.mxu0 0.0
    %858 = vmatprep.subr.mxu0 0.0
    %859 = vmatpush2.msra.mxu0 0.0
    %860 = vmatprep.subr.mxu0 0.0
    %861 = vmatpush2.msra.mxu0 0.0
    %862 = vmatprep.subr.mxu0 0.0
    %863 = vmatpush2.msra.mxu0 0.0
    %864 = vmatprep.subr.mxu0 0.0
    %865 = vmatpush2.msra.mxu0 0.0
    %866 = vmatprep.subr.mxu0 0.0
    %867 = vmatpush2.msra.mxu0 0.0
    %868 = vmatprep.subr.mxu0 0.0
    %869 = vmatpush2.msra.mxu0 0.0
    %870 = vmatprep.subr.mxu0 0.0
    %871 = vmatpush2.msra.mxu0 0.0
    %872 = vmatprep.subr.mxu0 0.0
    %873 = vmatpush2.msra.mxu0 0.0
    %874 = vmatprep.mubr.f32.mxu0 0.0
    %875 = vmatmul.mubr.f32.gmra.mxu0 %v808
    %v876 = vpop.f32.mrf.mxu0
    %v877 = vadd.f32 %v803, %v876
    %v878 = vpop.f32.mrf.mxu0
    %879 = vdwg.mxu0
    %v880 = vmax.f32 %v877, 0.0
    %v881 = vld [vmem:[#allocation11] sm:$0xff]
    %v882 = vld [vmem:[#allocation11 + $0x8] sm:$0xff]
    %v883 = vld [vmem:[#allocation11 + $0x10] sm:$0xff]
    %v884 = vld [vmem:[#allocation11 + $0x18] sm:$0xff]
    %v885 = vld [vmem:[#allocation11 + $0x20] sm:$0xff]
    %v886 = vld [vmem:[#allocation11 + $0x28] sm:$0xff]
    %v887 = vld [vmem:[#allocation11 + $0x30] sm:$0xff]
    %v888 = vld [vmem:[#allocation11 + $0x38] sm:$0xff]
    %v889 = vld [vmem:[#allocation11 + $0x40] sm:$0xff]
    %v890 = vld [vmem:[#allocation11 + $0x48] sm:$0xff]
    %v891 = vld [vmem:[#allocation11 + $0x50] sm:$0xff]
    %v892 = vld [vmem:[#allocation11 + $0x58] sm:$0xff]
    %v893 = vld [vmem:[#allocation11 + $0x60] sm:$0xff]
    %v894 = vld [vmem:[#allocation11 + $0x68] sm:$0xff]
    %v895 = vld [vmem:[#allocation11 + $0x70] sm:$0xff]
    %v896 = vld [vmem:[#allocation11 + $0x78] sm:$0xff]
    %v897 = vld [vmem:[%s7] sm:$0x1]
    %v899 = vlaneseq
    %v900 = vshrl.u32 %v899, 7
    %v901 = vsub.s32 0, %v900
    %v902 = vrot.slane %v897, %v901
    %904 = vmatprep.subr.mxu0 0.0
    %905 = vmatpush1.msra.mxu0 %v896
    %906 = vmatprep.subr.mxu0 0.0
    %907 = vmatpush1.msra.mxu0 %v895
    %908 = vmatprep.subr.mxu0 0.0
    %909 = vmatpush1.msra.mxu0 %v894
    %910 = vmatprep.subr.mxu0 0.0
    %911 = vmatpush1.msra.mxu0 %v893
    %912 = vmatprep.subr.mxu0 0.0
    %913 = vmatpush1.msra.mxu0 %v892
    %914 = vmatprep.subr.mxu0 0.0
    %915 = vmatpush1.msra.mxu0 %v891
    %916 = vmatprep.subr.mxu0 0.0
    %917 = vmatpush1.msra.mxu0 %v890
    %918 = vmatprep.subr.mxu0 0.0
    %919 = vmatpush1.msra.mxu0 %v889
    %920 = vmatprep.subr.mxu0 0.0
    %921 = vmatpush1.msra.mxu0 %v888
    %922 = vmatprep.subr.mxu0 0.0
    %923 = vmatpush1.msra.mxu0 %v887
    %924 = vmatprep.subr.mxu0 0.0
    %925 = vmatpush1.msra.mxu0 %v886
    %926 = vmatprep.subr.mxu0 0.0
    %927 = vmatpush1.msra.mxu0 %v885
    %928 = vmatprep.subr.mxu0 0.0
    %929 = vmatpush1.msra.mxu0 %v884
    %930 = vmatprep.subr.mxu0 0.0
    %931 = vmatpush1.msra.mxu0 %v883
    %932 = vmatprep.subr.mxu0 0.0
    %933 = vmatpush1.msra.mxu0 %v882
    %934 = vmatprep.subr.mxu0 0.0
    %935 = vmatpush1.msra.mxu0 %v881
    %936 = vmatprep.subr.mxu0 0.0
    %937 = vmatpush2.msra.mxu0 0.0
    %938 = vmatprep.subr.mxu0 0.0
    %939 = vmatpush2.msra.mxu0 0.0
    %940 = vmatprep.subr.mxu0 0.0
    %941 = vmatpush2.msra.mxu0 0.0
    %942 = vmatprep.subr.mxu0 0.0
    %943 = vmatpush2.msra.mxu0 0.0
    %944 = vmatprep.subr.mxu0 0.0
    %945 = vmatpush2.msra.mxu0 0.0
    %946 = vmatprep.subr.mxu0 0.0
    %947 = vmatpush2.msra.mxu0 0.0
    %948 = vmatprep.subr.mxu0 0.0
    %949 = vmatpush2.msra.mxu0 0.0
    %950 = vmatprep.subr.mxu0 0.0
    %951 = vmatpush2.msra.mxu0 0.0
    %952 = vmatprep.subr.mxu0 0.0
    %953 = vmatpush2.msra.mxu0 0.0
    %954 = vmatprep.subr.mxu0 0.0
    %955 = vmatpush2.msra.mxu0 0.0
    %956 = vmatprep.subr.mxu0 0.0
    %957 = vmatpush2.msra.mxu0 0.0
    %958 = vmatprep.subr.mxu0 0.0
    %959 = vmatpush2.msra.mxu0 0.0
    %960 = vmatprep.subr.mxu0 0.0
    %961 = vmatpush2.msra.mxu0 0.0
    %962 = vmatprep.subr.mxu0 0.0
    %963 = vmatpush2.msra.mxu0 0.0
    %964 = vmatprep.subr.mxu0 0.0
    %965 = vmatpush2.msra.mxu0 0.0
    %966 = vmatprep.subr.mxu0 0.0
    %967 = vmatpush2.msra.mxu0 0.0
    %968 = vmatprep.mubr.f32.mxu0 0.0
    %969 = vmatmul.mubr.f32.gmra.mxu0 %v880
    %v970 = vpop.f32.mrf.mxu0
    %v971 = vadd.f32 %v902, %v970
    %v972 = vpop.f32.mrf.mxu0
    %973 = vdwg.mxu0
    %974 = vst [vmem:[#allocation12] sm:$0xff] %v971
    // Predicated region
    $region54: #{tpu_custom_call.1} parent=1 // pred_check
      _
    $region55: #{tpu_custom_call.1} parent=1 // pred_check_branch
      %976 = sbr.rel (0) target = $region57
    $region56: #{tpu_custom_call.1} parent=1 // pred_region
      %s978 = ssub.s32 128, 128
      %979 = vsyncadd [#allocation5], %s978
      %s981 = sshll.u32 [#allocation12], 4
      %s982 = int_to_ptr.vmem [resolvable:$true] %s981
      %984 = dma.vmem_to_hbm [thread:$0]  %s982, 128, %s8, [#allocation5]
    $region57: #{tpu_custom_call.1} parent=1 // pred_fallthru
      _
    // Predicated region
    $region58: #{tpu_custom_call.1} parent=1 // pred_check
      _
    $region59: #{tpu_custom_call.1} parent=1 // pred_check_branch
      %986 = sbr.rel (0) target = $region61
    $region60: #{tpu_custom_call.1} parent=1 // pred_region
      %987 = dma.done [#allocation5], 128
    $region61: #{tpu_custom_call.1} parent=1 // pred_fallthru
      _
    %988 = vsyncpa [#allocation4], 1
    %989 = vsyncpa [#allocation7], 1
    %990 = vsyncpa [#allocation10], 1
    %991 = vsyncpa [#allocation5], 1

</llo_original>
